<compile_context>
chip_gen: v6e
topology: v6e:2x2x1
jax: 0.10.0
libtpu: 0.0.40
codegen_flags: <defaults>
</compile_context>

<pallas_src>
import jax
import jax.numpy as jnp
from jax.experimental import pallas as pl
from jax.experimental.pallas import tpu as pltpu

LANE = 128  # TPU lane width; natural MXU column quantum on all generations.


def _round_up(n, m):
    return ((n + m - 1) // m) * m


def _mlp_kernel(x_ref, w1_ref, w2_ref, w3_ref, b_ref, o_ref):
    """One (tile_m x lanes) slab of the 3-layer MLP, fully fused.

    x_ref : (tile_m, in_features)   compute dtype (f32 or bf16), unpadded K
    w1_ref: (in_features, HID_PAD)  compute dtype, zero-padded out-cols
    w2_ref: (HID_PAD, HID_PAD)      compute dtype, zero-padded
    w3_ref: (HID_PAD, C_PAD)        compute dtype, zero-padded
    b_ref : (8, PAD)                f32; rows 0/1/2 hold b1/b2/b3 (zero-padded)
    o_ref : (tile_m, C_PAD)         f32, lane-dense
    """
    mxu_dtype = w1_ref.dtype
    hid_pad = w1_ref.shape[1]
    c_pad = w3_ref.shape[1]

    x = x_ref[...]
    b = b_ref[...]                       # (8, PAD) f32 — one vreg
    b1 = b[0:1, :hid_pad]
    b2 = b[1:2, :hid_pad]
    b3 = b[2:3, :c_pad]

    # Layer 1: MXU matmul (f32 accumulate) + f32 epilogue (bias, ReLU).
    h1 = jnp.dot(x, w1_ref[...], preferred_element_type=jnp.float32) + b1
    h1 = jnp.maximum(h1, 0.0)

    # Layer 2.
    h2 = jnp.dot(h1.astype(mxu_dtype), w2_ref[...],
                 preferred_element_type=jnp.float32) + b2
    h2 = jnp.maximum(h2, 0.0)

    # Layer 3 (no activation).
    out = jnp.dot(h2.astype(mxu_dtype), w3_ref[...],
                  preferred_element_type=jnp.float32) + b3
    o_ref[...] = out.astype(o_ref.dtype)


def pack_params(params, compute_dtype=jnp.bfloat16):
    """Pad/cast weights ONCE (cache the result; do not rebuild per forward).

    Weights come in as (in_features, out_features).  Output-feature dims are
    lane-padded to multiples of 128 (zero padding is exact through matmul and
    ReLU); the x/K axis of w1 is left at its true extent so x needs no padding.
    """
    w1, b1 = params["w1"], params["b1"]
    w2, b2 = params["w2"], params["b2"]
    w3, b3 = params["w3"], params["b3"]
    in_features, hid = w1.shape
    C = w3.shape[1]

    HID_PAD = _round_up(hid, LANE)
    C_PAD = _round_up(C, LANE)
    PAD = max(HID_PAD, C_PAD)

    cdt = compute_dtype
    w1p = jnp.zeros((in_features, HID_PAD), cdt).at[:, :hid].set(w1.astype(cdt))
    w2p = jnp.zeros((HID_PAD, HID_PAD), cdt).at[:hid, :hid].set(w2.astype(cdt))
    w3p = jnp.zeros((HID_PAD, C_PAD), cdt).at[:hid, :C].set(w3.astype(cdt))

    # Pack the three biases into one (8, PAD) f32 slab (single operand, one vreg).
    bp = jnp.zeros((8, PAD), jnp.float32)
    bp = bp.at[0, :hid].set(b1.reshape(-1).astype(jnp.float32))
    bp = bp.at[1, :hid].set(b2.reshape(-1).astype(jnp.float32))
    bp = bp.at[2, :C].set(b3.reshape(-1).astype(jnp.float32))

    return {"w1": w1p, "w2": w2p, "w3": w3p, "b": bp,
            "input_size": in_features, "num_classes": C}


def _pick_tile_m(B, in_features, itemsize):
    """Adaptive batch tile.

    Small B -> one full-extent block (legal for any dtype, zero batch padding).
    Large B -> an EVEN number of tiles (balances v7x's two TensorCores), each
    at most 1024 rows, rounded to the dtype's sublane quantum, and capped so
    the double-buffered x tile stays inside v5e's 16 MiB default scoped VMEM.
    """
    sublane = 32 // itemsize                       # 8 for f32, 16 for bf16
    bytes_per_row = max(1, in_features * itemsize)
    cap = min(1024, max(sublane, ((4 << 20) // bytes_per_row) // sublane * sublane))
    if B <= 256 and B <= cap:
        return B
    n_tiles = max(2, pl.cdiv(B, cap))
    if n_tiles % 2:                                # keep the parallel grid even
        n_tiles += 1
    return _round_up(pl.cdiv(B, n_tiles), sublane)


def neuralnet_forward(x, packed, *, tile_m=None):
    """Fused MLP forward.

    x: (B, input_size) float32 (or bf16).  packed: output of pack_params().
    Returns (B, num_classes) float32.
    """
    w1p, w2p, w3p, bp = packed["w1"], packed["w2"], packed["w3"], packed["b"]
    C = packed["num_classes"]

    B, in_features = x.shape
    assert in_features == w1p.shape[0], "input feature dim mismatch"
    HID_PAD = w1p.shape[1]
    C_PAD = w3p.shape[1]

    cdt = w1p.dtype
    x = x.astype(cdt)                    # no-op for f32; plain cast for bf16
    itemsize = jnp.dtype(cdt).itemsize

    if tile_m is None:
        tile_m = _pick_tile_m(B, in_features, itemsize)
    grid_m = pl.cdiv(B, tile_m)

    # Advisory cost hint so XLA can schedule neighboring ops around the call.
    flops = 2 * B * (in_features * HID_PAD + HID_PAD * HID_PAD + HID_PAD * C_PAD)
    bytes_accessed = (B * in_features * itemsize
                      + (w1p.size + w2p.size + w3p.size) * itemsize
                      + bp.size * 4
                      + B * C_PAD * 4)

    # TODO(synk): for very large input_size (big BoW vocab, ~10k+ words) add a
    # K grid axis on layer 1 (accumulator scratch + pl.when init/finalize,
    # marked "arbitrary" after the parallel batch axis) so the x/w1 tiles stay
    # inside v7x's 64 MiB VMEM; not needed at these shapes.
    out_padded = pl.pallas_call(
        _mlp_kernel,
        out_shape=jax.ShapeDtypeStruct((B, C_PAD), jnp.float32),
        grid=(grid_m,),
        in_specs=[
            # Batch tile marches along the grid; weights/biases stay resident
            # (index_map returns (0, 0) every step -> DMA'd into VMEM once).
            pl.BlockSpec((tile_m, in_features), lambda i: (i, 0)),
            pl.BlockSpec((in_features, HID_PAD), lambda i: (0, 0)),
            pl.BlockSpec((HID_PAD, HID_PAD), lambda i: (0, 0)),
            pl.BlockSpec((HID_PAD, C_PAD), lambda i: (0, 0)),
            pl.BlockSpec(bp.shape, lambda i: (0, 0)),
        ],
        out_specs=pl.BlockSpec((tile_m, C_PAD), lambda i: (i, 0)),
        compiler_params=pltpu.CompilerParams(
            # Batch axis is independent -> shard across TensorCores on v7x.
            dimension_semantics=("parallel",),
        ),
        cost_estimate=pl.CostEstimate(flops=flops, transcendentals=0,
                                      bytes_accessed=bytes_accessed),
    )(x, w1p, w2p, w3p, bp)

    return out_padded[:, :C]


def neuralnet_reference(x, params, compute_dtype=jnp.float32):
    """Pure-JAX reference with the same operand-rounding as the kernel."""
    def cast(a):
        return a.astype(compute_dtype).astype(jnp.float32)

    h = cast(x) @ cast(params["w1"]) + params["b1"]
    h = jnp.maximum(h, 0.0)
    h = cast(h) @ cast(params["w2"]) + params["b2"]
    h = jnp.maximum(h, 0.0)
    return cast(h) @ cast(params["w3"]) + params["b3"]


def init_params(key, input_size, hidden_size, num_classes):
    """Deterministic synthetic params (PyTorch-Linear-like uniform init)."""
    ks = jax.random.split(key, 6)

    def lin(kw, kb, fan_in, fan_out):
        bound = 1.0 / jnp.sqrt(jnp.float32(fan_in))
        # stored as (in, out): already-transposed vs. torch's (out, in)
        w = jax.random.uniform(kw, (fan_in, fan_out), jnp.float32, -bound, bound)
        b = jax.random.uniform(kb, (1, fan_out), jnp.float32, -bound, bound)
        return w, b

    w1, b1 = lin(ks[0], ks[1], input_size, hidden_size)
    w2, b2 = lin(ks[2], ks[3], hidden_size, hidden_size)
    w3, b3 = lin(ks[4], ks[5], hidden_size, num_classes)
    return {"w1": w1, "b1": b1, "w2": w2, "b2": b2, "w3": w3, "b3": b3}


if __name__ == "__main__":
    # Shapes consistent with the module: bag-of-words input of size
    # `input_size=len(all_words)` -> hidden_size=8 -> num_classes.
    batch, input_size, hidden_size, num_classes = 8, 32, 8, 5

    key = jax.random.PRNGKey(0)
    kx, kp, kx2 = jax.random.split(key, 3)
    x = jax.random.uniform(kx, (batch, input_size), jnp.float32)  # BoW-style input
    params = init_params(kp, input_size, hidden_size, num_classes)

    # Padded weights / bias slab built once per dtype and reused (review item).
    packed_f32 = pack_params(params, compute_dtype=jnp.float32)
    packed_bf16 = pack_params(params)  # default: bf16 operands, f32 epilogue

    # 1) Small-batch f32 run: single full-extent block, no x/batch padding.
    out = jax.block_until_ready(neuralnet_forward(x, packed_f32))
    ref = neuralnet_reference(x, params)
    assert out.shape == (batch, num_classes)
    assert jnp.allclose(out, ref, atol=1e-5, rtol=1e-5)

    # 2) Small-batch bf16-operand run (v6e/v7x MXU-native; f32 accumulate).
    out_bf16 = jax.block_until_ready(neuralnet_forward(x, packed_bf16))
    ref_bf16 = neuralnet_reference(x, params, compute_dtype=jnp.bfloat16)
    assert out_bf16.shape == (batch, num_classes)
    assert jnp.allclose(out_bf16, ref_bf16, atol=5e-2, rtol=5e-2)

    # 3) Larger batch exercising a multi-step balanced grid
    #    (B=300 -> 2 tiles, partial last block handled by Pallas masking).
    big_b = 300
    x_big = jax.random.uniform(kx2, (big_b, input_size), jnp.float32)
    out_big = jax.block_until_ready(neuralnet_forward(x_big, packed_f32))
    ref_big = neuralnet_reference(x_big, params)
    assert out_big.shape == (big_b, num_classes)
    assert jnp.allclose(out_big, ref_big, atol=1e-5, rtol=1e-5)

    # 4) Same multi-tile grid on the bf16 default path (16-row sublane quantum).
    out_big_bf16 = jax.block_until_ready(neuralnet_forward(x_big, packed_bf16))
    ref_big_bf16 = neuralnet_reference(x_big, params, compute_dtype=jnp.bfloat16)
    assert out_big_bf16.shape == (big_b, num_classes)
    assert jnp.allclose(out_big_bf16, ref_big_bf16, atol=5e-2, rtol=5e-2)

    print("KERNEL_OK")
</pallas_src>

<mosaic_0001>
module attributes {stable_mosaic.version = 11 : i64} {
  func.func @_mlp_kernel(%arg0: i32, %arg1: memref<8x32xf32, #tpu.memory_space<vmem>>, %arg2: memref<32x128xf32, #tpu.memory_space<vmem>>, %arg3: memref<128x128xf32, #tpu.memory_space<vmem>>, %arg4: memref<128x128xf32, #tpu.memory_space<vmem>>, %arg5: memref<8x128xf32, #tpu.memory_space<vmem>>, %arg6: memref<8x128xf32, #tpu.memory_space<vmem>>) attributes {dimension_semantics = [#tpu.dimension_semantics<parallel>], iteration_bounds = array<i64: 1>, scalar_prefetch = 0 : i64, scratch_operands = 0 : i64, tpu.core_type = #tpu.core_type<tc>, window_params = [{transform_indices = @transform_0, window_bounds = array<i64: 8, 32>}, {pipeline_mode = #tpu.pipeline_mode<synchronous>, transform_indices = @transform_1, window_bounds = array<i64: 32, 128>}, {pipeline_mode = #tpu.pipeline_mode<synchronous>, transform_indices = @transform_2, window_bounds = array<i64: 128, 128>}, {pipeline_mode = #tpu.pipeline_mode<synchronous>, transform_indices = @transform_3, window_bounds = array<i64: 128, 128>}, {pipeline_mode = #tpu.pipeline_mode<synchronous>, transform_indices = @transform_4, window_bounds = array<i64: 8, 128>}, {transform_indices = @transform_5, window_bounds = array<i64: 8, 128>}]} {
    %c0 = arith.constant 0 : index
    %c0_0 = arith.constant 0 : index
    %0 = vector.load %arg1[%c0, %c0_0] : memref<8x32xf32, #tpu.memory_space<vmem>>, vector<8x32xf32>
    %c0_1 = arith.constant 0 : index
    %c0_2 = arith.constant 0 : index
    %1 = vector.load %arg5[%c0_1, %c0_2] : memref<8x128xf32, #tpu.memory_space<vmem>>, vector<8x128xf32>
    %2 = vector.extract_strided_slice %1 {offsets = [0, 0], sizes = [1, 128], strides = [1, 1]} : vector<8x128xf32> to vector<1x128xf32>
    %3 = vector.extract_strided_slice %1 {offsets = [1, 0], sizes = [1, 128], strides = [1, 1]} : vector<8x128xf32> to vector<1x128xf32>
    %4 = vector.extract_strided_slice %1 {offsets = [2, 0], sizes = [1, 128], strides = [1, 1]} : vector<8x128xf32> to vector<1x128xf32>
    %c0_3 = arith.constant 0 : index
    %c0_4 = arith.constant 0 : index
    %5 = vector.load %arg2[%c0_3, %c0_4] : memref<32x128xf32, #tpu.memory_space<vmem>>, vector<32x128xf32>
    %cst = arith.constant dense<0.000000e+00> : vector<8x128xf32>
    %6 = tpu.matmul %0, %5, %cst {dimension_numbers = #tpu.dot_dimension_numbers<[1], [0], [0], [1], [0, 0, 1, 1], [], []>} : vector<8x32xf32>, vector<32x128xf32>, vector<8x128xf32> -> vector<8x128xf32>
    %7 = vector.broadcast %2 : vector<1x128xf32> to vector<8x128xf32>
    %8 = arith.addf %6, %7 : vector<8x128xf32>
    %cst_5 = arith.constant 0.000000e+00 : f32
    %9 = vector.broadcast %cst_5 : f32 to vector<8x128xf32>
    %10 = arith.maximumf %8, %9 : vector<8x128xf32>
    %c0_6 = arith.constant 0 : index
    %c0_7 = arith.constant 0 : index
    %11 = vector.load %arg3[%c0_6, %c0_7] : memref<128x128xf32, #tpu.memory_space<vmem>>, vector<128x128xf32>
    %cst_8 = arith.constant dense<0.000000e+00> : vector<8x128xf32>
    %12 = tpu.matmul %10, %11, %cst_8 {dimension_numbers = #tpu.dot_dimension_numbers<[1], [0], [0], [1], [0, 0, 1, 1], [], []>} : vector<8x128xf32>, vector<128x128xf32>, vector<8x128xf32> -> vector<8x128xf32>
    %13 = vector.broadcast %3 : vector<1x128xf32> to vector<8x128xf32>
    %14 = arith.addf %12, %13 : vector<8x128xf32>
    %cst_9 = arith.constant 0.000000e+00 : f32
    %15 = vector.broadcast %cst_9 : f32 to vector<8x128xf32>
    %16 = arith.maximumf %14, %15 : vector<8x128xf32>
    %c0_10 = arith.constant 0 : index
    %c0_11 = arith.constant 0 : index
    %17 = vector.load %arg4[%c0_10, %c0_11] : memref<128x128xf32, #tpu.memory_space<vmem>>, vector<128x128xf32>
    %cst_12 = arith.constant dense<0.000000e+00> : vector<8x128xf32>
    %18 = tpu.matmul %16, %17, %cst_12 {dimension_numbers = #tpu.dot_dimension_numbers<[1], [0], [0], [1], [0, 0, 1, 1], [], []>} : vector<8x128xf32>, vector<128x128xf32>, vector<8x128xf32> -> vector<8x128xf32>
    %19 = vector.broadcast %4 : vector<1x128xf32> to vector<8x128xf32>
    %20 = arith.addf %18, %19 : vector<8x128xf32>
    %c0_13 = arith.constant 0 : index
    %c0_14 = arith.constant 0 : index
    %21 = vector.load %arg6[%c0_13, %c0_14] : memref<8x128xf32, #tpu.memory_space<vmem>>, vector<8x128xf32>
    tpu.vector_store %arg6[%c0_13, %c0_14], %20 {strides = array<i32>} : memref<8x128xf32, #tpu.memory_space<vmem>>, vector<8x128xf32>,
    return
  }
  func.func @transform_0(%arg0: i32) -> (i32, i32) {
    %c0_i32 = arith.constant 0 : i32
    %c0_i32_0 = arith.constant 0 : i32
    return %arg0, %c0_i32 : i32, i32
  }
  func.func @transform_1(%arg0: i32) -> (i32, i32) {
    %c0_i32 = arith.constant 0 : i32
    %c0_i32_0 = arith.constant 0 : i32
    %c0_i32_1 = arith.constant 0 : i32
    return %c0_i32, %c0_i32_0 : i32, i32
  }
  func.func @transform_2(%arg0: i32) -> (i32, i32) {
    %c0_i32 = arith.constant 0 : i32
    %c0_i32_0 = arith.constant 0 : i32
    %c0_i32_1 = arith.constant 0 : i32
    return %c0_i32, %c0_i32_0 : i32, i32
  }
  func.func @transform_3(%arg0: i32) -> (i32, i32) {
    %c0_i32 = arith.constant 0 : i32
    %c0_i32_0 = arith.constant 0 : i32
    %c0_i32_1 = arith.constant 0 : i32
    return %c0_i32, %c0_i32_0 : i32, i32
  }
  func.func @transform_4(%arg0: i32) -> (i32, i32) {
    %c0_i32 = arith.constant 0 : i32
    %c0_i32_0 = arith.constant 0 : i32
    %c0_i32_1 = arith.constant 0 : i32
    return %c0_i32, %c0_i32_0 : i32, i32
  }
  func.func @transform_5(%arg0: i32) -> (i32, i32) {
    %c0_i32 = arith.constant 0 : i32
    %c0_i32_0 = arith.constant 0 : i32
    return %arg0, %c0_i32 : i32, i32
  }
}

</mosaic_0001>

<llo_original>
// kernel: tpu_custom_call.1
$region0: #{tpu_custom_call.1}
  #allocation0 [shape = 'u32[]', space=smem, size = 0x4, offset = 0x4, fixed_abs, tag = 'smem constant byte address 0x4 - core index']
  #allocation1 [shape = 'u32[144,128]{1,0:T(1,128)}', space=vmem, size = 0x12000, scoped, tag = 'internal scratch']
  %s0 = inlined_call_operand.hbm [shape: f32[8,32], index: 0, kind: input, shape index: {}]
  %s1 = inlined_call_operand.hbm [shape: f32[32,128], index: 1, kind: input, shape index: {}]
  %s2 = inlined_call_operand.hbm [shape: f32[128,128], index: 2, kind: input, shape index: {}]
  %s3 = inlined_call_operand.hbm [shape: f32[128,128], index: 3, kind: input, shape index: {}]
  %s4 = inlined_call_operand.hbm [shape: f32[8,128], index: 4, kind: input, shape index: {}]
  %s5 = inlined_call_operand.hbm [shape: f32[8,128], index: 5, kind: output, shape index: {}]
  %s6 = sld [smem:[#allocation0]]
  $region50: #{tpu_custom_call.1} parent=0
    _
  %s8 = ssub.s32 1, %s6
  %s9 = scalar_select 0, %s8, %s6
  $region1: #{tpu_custom_call.1} parent=0
    #allocation2 [shape = 'u8[4096]{0}', space=vmem, size = 0x1000, scoped, tag = 'input window, operand 0, single buffered']
    #allocation3 [shape = 's32[1]{0}', space=sflag, size = 0x4, scoped, tag = 'scoped memory for tpu_custom_call.1']
    #allocation4 [shape = 's32[1]{0}', space=sflag, size = 0x4, scoped, tag = 'scoped memory for tpu_custom_call.1']
    #allocation5 [shape = 'u8[16384]{0}', space=vmem, size = 0x4000, scoped, tag = 'input window, operand 1, single buffered']
    #allocation6 [shape = 's32[1]{0}', space=sflag, size = 0x4, scoped, tag = 'scoped memory for tpu_custom_call.1']
    #allocation7 [shape = 'u8[65536]{0}', space=vmem, size = 0x10000, scoped, tag = 'input window, operand 2, single buffered']
    #allocation8 [shape = 'u8[65536]{0}', space=vmem, size = 0x10000, scoped, tag = 'input window, operand 3, single buffered']
    #allocation9 [shape = 's32[1]{0}', space=sflag, size = 0x4, scoped, tag = 'scoped memory for tpu_custom_call.1']
    #allocation10 [shape = 'u8[4096]{0}', space=vmem, size = 0x1000, scoped, tag = 'input window, operand 4, single buffered']
    #allocation11 [shape = 'u8[4096]{0}', space=vmem, size = 0x1000, scoped, tag = 'output window, operand 0, single buffered']
    %10 = vsyncpa [#allocation3], 0
    %11 = vsyncpa [#allocation6], 0
    %12 = vsyncpa [#allocation9], 0
    %13 = vsyncpa [#allocation4], 0
    // Predicated region
    $region2: #{tpu_custom_call.1} parent=1 // pred_check
      _
    $region3: #{tpu_custom_call.1} parent=1 // pred_check_branch
      %15 = sbr.rel (0) target = $region5
    $region4: #{tpu_custom_call.1} parent=1 // pred_region
      %s17 = ssub.s32 128, 128
      %18 = vsyncadd [#allocation3], %s17
      %s20 = sshll.u32 [#allocation2], 4
      %s21 = int_to_ptr.vmem [resolvable:$true] %s20
      %23 = dma.hbm_to_vmem [thread:$0]  %s0, 128, %s21, [#allocation3]
    $region5: #{tpu_custom_call.1} parent=1 // pred_fallthru
      _
    // Predicated region
    $region6: #{tpu_custom_call.1} parent=1 // pred_check
      _
    $region7: #{tpu_custom_call.1} parent=1 // pred_check_branch
      %25 = sbr.rel (0) target = $region9
    $region8: #{tpu_custom_call.1} parent=1 // pred_region
      %s27 = ssub.s32 512, 512
      %28 = vsyncadd [#allocation6], %s27
      %s29 = sshll.u32 [#allocation5], 4
      %s30 = int_to_ptr.vmem [resolvable:$true] %s29
      %35 = dma.hbm_to_vmem [thread:$0]  %s1, 512, %s30, [#allocation6], 128, 128, 8
    $region9: #{tpu_custom_call.1} parent=1 // pred_fallthru
      _
    // Predicated region
    $region10: #{tpu_custom_call.1} parent=1 // pred_check
      _
    $region11: #{tpu_custom_call.1} parent=1 // pred_check_branch
      %37 = sbr.rel (0) target = $region13
    $region12: #{tpu_custom_call.1} parent=1 // pred_region
      %s39 = ssub.s32 2048, 2048
      %40 = vsyncadd [#allocation6], %s39
      %s41 = sshll.u32 [#allocation7], 4
      %s42 = int_to_ptr.vmem [resolvable:$true] %s41
      %47 = dma.hbm_to_vmem [thread:$0]  %s2, 2048, %s42, [#allocation6], 128, 128, 8
    $region13: #{tpu_custom_call.1} parent=1 // pred_fallthru
      _
    // Predicated region
    $region14: #{tpu_custom_call.1} parent=1 // pred_check
      _
    $region15: #{tpu_custom_call.1} parent=1 // pred_check_branch
      %49 = sbr.rel (0) target = $region17
    $region16: #{tpu_custom_call.1} parent=1 // pred_region
      %s51 = ssub.s32 2048, 2048
      %52 = vsyncadd [#allocation9], %s51
      %s53 = sshll.u32 [#allocation8], 4
      %s54 = int_to_ptr.vmem [resolvable:$true] %s53
      %59 = dma.hbm_to_vmem [thread:$0]  %s3, 2048, %s54, [#allocation9], 128, 128, 8
    $region17: #{tpu_custom_call.1} parent=1 // pred_fallthru
      _
    // Predicated region
    $region18: #{tpu_custom_call.1} parent=1 // pred_check
      _
    $region19: #{tpu_custom_call.1} parent=1 // pred_check_branch
      %61 = sbr.rel (0) target = $region21
    $region20: #{tpu_custom_call.1} parent=1 // pred_region
      %s63 = ssub.s32 128, 128
      %64 = vsyncadd [#allocation9], %s63
      %s66 = sshll.u32 [#allocation10], 4
      %s67 = int_to_ptr.vmem [resolvable:$true] %s66
      %69 = dma.hbm_to_vmem [thread:$0]  %s4, 128, %s67, [#allocation9]
    $region21: #{tpu_custom_call.1} parent=1 // pred_fallthru
      _
    // Predicated region
    $region22: #{tpu_custom_call.1} parent=1 // pred_check
      _
    $region23: #{tpu_custom_call.1} parent=1 // pred_check_branch
      %71 = sbr.rel (0) target = $region25
    $region24: #{tpu_custom_call.1} parent=1 // pred_region
      %72 = dma.done [#allocation3], 128
    $region25: #{tpu_custom_call.1} parent=1 // pred_fallthru
      _
    // Predicated region
    $region26: #{tpu_custom_call.1} parent=1 // pred_check
      _
    $region27: #{tpu_custom_call.1} parent=1 // pred_check_branch
      %74 = sbr.rel (0) target = $region29
    $region28: #{tpu_custom_call.1} parent=1 // pred_region
      %75 = dma.done [#allocation6], 512
    $region29: #{tpu_custom_call.1} parent=1 // pred_fallthru
      _
    // Predicated region
    $region30: #{tpu_custom_call.1} parent=1 // pred_check
      _
    $region31: #{tpu_custom_call.1} parent=1 // pred_check_branch
      %77 = sbr.rel (0) target = $region33
    $region32: #{tpu_custom_call.1} parent=1 // pred_region
      %78 = dma.done [#allocation6], 2048
    $region33: #{tpu_custom_call.1} parent=1 // pred_fallthru
      _
    // Predicated region
    $region34: #{tpu_custom_call.1} parent=1 // pred_check
      _
    $region35: #{tpu_custom_call.1} parent=1 // pred_check_branch
      %80 = sbr.rel (0) target = $region37
    $region36: #{tpu_custom_call.1} parent=1 // pred_region
      %81 = dma.done [#allocation9], 2048
    $region37: #{tpu_custom_call.1} parent=1 // pred_fallthru
      _
    // Predicated region
    $region38: #{tpu_custom_call.1} parent=1 // pred_check
      _
    $region39: #{tpu_custom_call.1} parent=1 // pred_check_branch
      %83 = sbr.rel (0) target = $region41
    $region40: #{tpu_custom_call.1} parent=1 // pred_region
      %84 = dma.done [#allocation9], 128
    $region41: #{tpu_custom_call.1} parent=1 // pred_fallthru
      _
    %v85 = vld [vmem:[#allocation2] sm:$0xff]
    %v86 = vld [vmem:[#allocation10] sm:$0xff]
    %v87 = vld [vmem:[#allocation5] sm:$0xff]
    %v88 = vld [vmem:[#allocation5 + $0x8] sm:$0xff]
    %v89 = vld [vmem:[#allocation5 + $0x10] sm:$0xff]
    %v90 = vld [vmem:[#allocation5 + $0x18] sm:$0xff]
    %v91 = vlaneseq
    %v92 = vshrl.u32 %v91, 7
    %v93 = vsub.s32 0, %v92
    %v94 = vrot.slane %v86, %v93
    %vm95 = vcmask 261120
    %v97 = vsel %vm95, %v85, 0
    %99 = vmatprep.subr.mxu0 0.0
    %100 = vmatpush1.msra.mxu0 0.0
    %101 = vmatprep.subr.mxu0 0.0
    %102 = vmatpush1.msra.mxu0 0.0
    %103 = vmatprep.subr.mxu0 0.0
    %104 = vmatpush1.msra.mxu0 0.0
    %105 = vmatprep.subr.mxu0 0.0
    %106 = vmatpush1.msra.mxu0 0.0
    %107 = vmatprep.subr.mxu0 0.0
    %108 = vmatpush1.msra.mxu0 0.0
    %109 = vmatprep.subr.mxu0 0.0
    %110 = vmatpush1.msra.mxu0 0.0
    %111 = vmatprep.subr.mxu0 0.0
    %112 = vmatpush1.msra.mxu0 0.0
    %113 = vmatprep.subr.mxu0 0.0
    %114 = vmatpush1.msra.mxu0 0.0
    %115 = vmatprep.subr.mxu0 0.0
    %116 = vmatpush1.msra.mxu0 0.0
    %117 = vmatprep.subr.mxu0 0.0
    %118 = vmatpush1.msra.mxu0 0.0
    %119 = vmatprep.subr.mxu0 0.0
    %120 = vmatpush1.msra.mxu0 0.0
    %121 = vmatprep.subr.mxu0 0.0
    %122 = vmatpush1.msra.mxu0 0.0
    %123 = vmatprep.subr.mxu0 0.0
    %124 = vmatpush1.msra.mxu0 %v90
    %125 = vmatprep.subr.mxu0 0.0
    %126 = vmatpush1.msra.mxu0 %v89
    %127 = vmatprep.subr.mxu0 0.0
    %128 = vmatpush1.msra.mxu0 %v88
    %129 = vmatprep.subr.mxu0 0.0
    %130 = vmatpush1.msra.mxu0 %v87
    %131 = vmatprep.subr.mxu0 0.0
    %132 = vmatpush2.msra.mxu0 0.0
    %133 = vmatprep.subr.mxu0 0.0
    %134 = vmatpush2.msra.mxu0 0.0
    %135 = vmatprep.subr.mxu0 0.0
    %136 = vmatpush2.msra.mxu0 0.0
    %137 = vmatprep.subr.mxu0 0.0
    %138 = vmatpush2.msra.mxu0 0.0
    %139 = vmatprep.subr.mxu0 0.0
    %140 = vmatpush2.msra.mxu0 0.0
    %141 = vmatprep.subr.mxu0 0.0
    %142 = vmatpush2.msra.mxu0 0.0
    %143 = vmatprep.subr.mxu0 0.0
    %144 = vmatpush2.msra.mxu0 0.0
    %145 = vmatprep.subr.mxu0 0.0
    %146 = vmatpush2.msra.mxu0 0.0
    %147 = vmatprep.subr.mxu0 0.0
    %148 = vmatpush2.msra.mxu0 0.0
    %149 = vmatprep.subr.mxu0 0.0
    %150 = vmatpush2.msra.mxu0 0.0
    %151 = vmatprep.subr.mxu0 0.0
    %152 = vmatpush2.msra.mxu0 0.0
    %153 = vmatprep.subr.mxu0 0.0
    %154 = vmatpush2.msra.mxu0 0.0
    %155 = vmatprep.subr.mxu0 0.0
    %156 = vmatpush2.msra.mxu0 0.0
    %157 = vmatprep.subr.mxu0 0.0
    %158 = vmatpush2.msra.mxu0 0.0
    %159 = vmatprep.subr.mxu0 0.0
    %160 = vmatpush2.msra.mxu0 0.0
    %161 = vmatprep.subr.mxu0 0.0
    %162 = vmatpush2.msra.mxu0 0.0
    %163 = vmatprep.mubr.f32.mxu0 0.0
    %164 = vmatmul.mubr.f32.gmra.mxu0 %v97
    %v165 = vpop.f32.mrf.mxu0
    %v166 = vadd.f32 %v94, %v165
    %v167 = vpop.f32.mrf.mxu0
    %168 = vdwg.mxu0
    %v169 = vmax.f32 %v166, 0.0
    %v170 = vld [vmem:[#allocation7] sm:$0xff]
    %v171 = vld [vmem:[#allocation7 + $0x8] sm:$0xff]
    %v172 = vld [vmem:[#allocation7 + $0x10] sm:$0xff]
    %v173 = vld [vmem:[#allocation7 + $0x18] sm:$0xff]
    %v174 = vld [vmem:[#allocation7 + $0x20] sm:$0xff]
    %v175 = vld [vmem:[#allocation7 + $0x28] sm:$0xff]
    %v176 = vld [vmem:[#allocation7 + $0x30] sm:$0xff]
    %v177 = vld [vmem:[#allocation7 + $0x38] sm:$0xff]
    %v178 = vld [vmem:[#allocation7 + $0x40] sm:$0xff]
    %v179 = vld [vmem:[#allocation7 + $0x48] sm:$0xff]
    %v180 = vld [vmem:[#allocation7 + $0x50] sm:$0xff]
    %v181 = vld [vmem:[#allocation7 + $0x58] sm:$0xff]
    %v182 = vld [vmem:[#allocation7 + $0x60] sm:$0xff]
    %v183 = vld [vmem:[#allocation7 + $0x68] sm:$0xff]
    %v184 = vld [vmem:[#allocation7 + $0x70] sm:$0xff]
    %v185 = vld [vmem:[#allocation7 + $0x78] sm:$0xff]
    %v186 = vlaneseq
    %v187 = vshrl.u32 %v186, 7
    %v188 = vsub.s32 1, %v187
    %v189 = vrot.slane %v86, %v188
    %190 = vmatprep.subr.mxu0 0.0
    %191 = vmatpush1.msra.mxu0 %v185
    %192 = vmatprep.subr.mxu0 0.0
    %193 = vmatpush1.msra.mxu0 %v184
    %194 = vmatprep.subr.mxu0 0.0
    %195 = vmatpush1.msra.mxu0 %v183
    %196 = vmatprep.subr.mxu0 0.0
    %197 = vmatpush1.msra.mxu0 %v182
    %198 = vmatprep.subr.mxu0 0.0
    %199 = vmatpush1.msra.mxu0 %v181
    %200 = vmatprep.subr.mxu0 0.0
    %201 = vmatpush1.msra.mxu0 %v180
    %202 = vmatprep.subr.mxu0 0.0
    %203 = vmatpush1.msra.mxu0 %v179
    %204 = vmatprep.subr.mxu0 0.0
    %205 = vmatpush1.msra.mxu0 %v178
    %206 = vmatprep.subr.mxu0 0.0
    %207 = vmatpush1.msra.mxu0 %v177
    %208 = vmatprep.subr.mxu0 0.0
    %209 = vmatpush1.msra.mxu0 %v176
    %210 = vmatprep.subr.mxu0 0.0
    %211 = vmatpush1.msra.mxu0 %v175
    %212 = vmatprep.subr.mxu0 0.0
    %213 = vmatpush1.msra.mxu0 %v174
    %214 = vmatprep.subr.mxu0 0.0
    %215 = vmatpush1.msra.mxu0 %v173
    %216 = vmatprep.subr.mxu0 0.0
    %217 = vmatpush1.msra.mxu0 %v172
    %218 = vmatprep.subr.mxu0 0.0
    %219 = vmatpush1.msra.mxu0 %v171
    %220 = vmatprep.subr.mxu0 0.0
    %221 = vmatpush1.msra.mxu0 %v170
    %222 = vmatprep.subr.mxu0 0.0
    %223 = vmatpush2.msra.mxu0 0.0
    %224 = vmatprep.subr.mxu0 0.0
    %225 = vmatpush2.msra.mxu0 0.0
    %226 = vmatprep.subr.mxu0 0.0
    %227 = vmatpush2.msra.mxu0 0.0
    %228 = vmatprep.subr.mxu0 0.0
    %229 = vmatpush2.msra.mxu0 0.0
    %230 = vmatprep.subr.mxu0 0.0
    %231 = vmatpush2.msra.mxu0 0.0
    %232 = vmatprep.subr.mxu0 0.0
    %233 = vmatpush2.msra.mxu0 0.0
    %234 = vmatprep.subr.mxu0 0.0
    %235 = vmatpush2.msra.mxu0 0.0
    %236 = vmatprep.subr.mxu0 0.0
    %237 = vmatpush2.msra.mxu0 0.0
    %238 = vmatprep.subr.mxu0 0.0
    %239 = vmatpush2.msra.mxu0 0.0
    %240 = vmatprep.subr.mxu0 0.0
    %241 = vmatpush2.msra.mxu0 0.0
    %242 = vmatprep.subr.mxu0 0.0
    %243 = vmatpush2.msra.mxu0 0.0
    %244 = vmatprep.subr.mxu0 0.0
    %245 = vmatpush2.msra.mxu0 0.0
    %246 = vmatprep.subr.mxu0 0.0
    %247 = vmatpush2.msra.mxu0 0.0
    %248 = vmatprep.subr.mxu0 0.0
    %249 = vmatpush2.msra.mxu0 0.0
    %250 = vmatprep.subr.mxu0 0.0
    %251 = vmatpush2.msra.mxu0 0.0
    %252 = vmatprep.subr.mxu0 0.0
    %253 = vmatpush2.msra.mxu0 0.0
    %254 = vmatprep.mubr.f32.mxu0 0.0
    %255 = vmatmul.mubr.f32.gmra.mxu0 %v169
    %v256 = vpop.f32.mrf.mxu0
    %v257 = vadd.f32 %v189, %v256
    %v258 = vpop.f32.mrf.mxu0
    %259 = vdwg.mxu0
    %v260 = vmax.f32 %v257, 0.0
    %v261 = vld [vmem:[#allocation8] sm:$0xff]
    %v262 = vld [vmem:[#allocation8 + $0x8] sm:$0xff]
    %v263 = vld [vmem:[#allocation8 + $0x10] sm:$0xff]
    %v264 = vld [vmem:[#allocation8 + $0x18] sm:$0xff]
    %v265 = vld [vmem:[#allocation8 + $0x20] sm:$0xff]
    %v266 = vld [vmem:[#allocation8 + $0x28] sm:$0xff]
    %v267 = vld [vmem:[#allocation8 + $0x30] sm:$0xff]
    %v268 = vld [vmem:[#allocation8 + $0x38] sm:$0xff]
    %v269 = vld [vmem:[#allocation8 + $0x40] sm:$0xff]
    %v270 = vld [vmem:[#allocation8 + $0x48] sm:$0xff]
    %v271 = vld [vmem:[#allocation8 + $0x50] sm:$0xff]
    %v272 = vld [vmem:[#allocation8 + $0x58] sm:$0xff]
    %v273 = vld [vmem:[#allocation8 + $0x60] sm:$0xff]
    %v274 = vld [vmem:[#allocation8 + $0x68] sm:$0xff]
    %v275 = vld [vmem:[#allocation8 + $0x70] sm:$0xff]
    %v276 = vld [vmem:[#allocation8 + $0x78] sm:$0xff]
    %v277 = vlaneseq
    %v278 = vshrl.u32 %v277, 7
    %v279 = vsub.s32 2, %v278
    %v280 = vrot.slane %v86, %v279
    %281 = vmatprep.subr.mxu0 0.0
    %282 = vmatpush1.msra.mxu0 %v276
    %283 = vmatprep.subr.mxu0 0.0
    %284 = vmatpush1.msra.mxu0 %v275
    %285 = vmatprep.subr.mxu0 0.0
    %286 = vmatpush1.msra.mxu0 %v274
    %287 = vmatprep.subr.mxu0 0.0
    %288 = vmatpush1.msra.mxu0 %v273
    %289 = vmatprep.subr.mxu0 0.0
    %290 = vmatpush1.msra.mxu0 %v272
    %291 = vmatprep.subr.mxu0 0.0
    %292 = vmatpush1.msra.mxu0 %v271
    %293 = vmatprep.subr.mxu0 0.0
    %294 = vmatpush1.msra.mxu0 %v270
    %295 = vmatprep.subr.mxu0 0.0
    %296 = vmatpush1.msra.mxu0 %v269
    %297 = vmatprep.subr.mxu0 0.0
    %298 = vmatpush1.msra.mxu0 %v268
    %299 = vmatprep.subr.mxu0 0.0
    %300 = vmatpush1.msra.mxu0 %v267
    %301 = vmatprep.subr.mxu0 0.0
    %302 = vmatpush1.msra.mxu0 %v266
    %303 = vmatprep.subr.mxu0 0.0
    %304 = vmatpush1.msra.mxu0 %v265
    %305 = vmatprep.subr.mxu0 0.0
    %306 = vmatpush1.msra.mxu0 %v264
    %307 = vmatprep.subr.mxu0 0.0
    %308 = vmatpush1.msra.mxu0 %v263
    %309 = vmatprep.subr.mxu0 0.0
    %310 = vmatpush1.msra.mxu0 %v262
    %311 = vmatprep.subr.mxu0 0.0
    %312 = vmatpush1.msra.mxu0 %v261
    %313 = vmatprep.subr.mxu0 0.0
    %314 = vmatpush2.msra.mxu0 0.0
    %315 = vmatprep.subr.mxu0 0.0
    %316 = vmatpush2.msra.mxu0 0.0
    %317 = vmatprep.subr.mxu0 0.0
    %318 = vmatpush2.msra.mxu0 0.0
    %319 = vmatprep.subr.mxu0 0.0
    %320 = vmatpush2.msra.mxu0 0.0
    %321 = vmatprep.subr.mxu0 0.0
    %322 = vmatpush2.msra.mxu0 0.0
    %323 = vmatprep.subr.mxu0 0.0
    %324 = vmatpush2.msra.mxu0 0.0
    %325 = vmatprep.subr.mxu0 0.0
    %326 = vmatpush2.msra.mxu0 0.0
    %327 = vmatprep.subr.mxu0 0.0
    %328 = vmatpush2.msra.mxu0 0.0
    %329 = vmatprep.subr.mxu0 0.0
    %330 = vmatpush2.msra.mxu0 0.0
    %331 = vmatprep.subr.mxu0 0.0
    %332 = vmatpush2.msra.mxu0 0.0
    %333 = vmatprep.subr.mxu0 0.0
    %334 = vmatpush2.msra.mxu0 0.0
    %335 = vmatprep.subr.mxu0 0.0
    %336 = vmatpush2.msra.mxu0 0.0
    %337 = vmatprep.subr.mxu0 0.0
    %338 = vmatpush2.msra.mxu0 0.0
    %339 = vmatprep.subr.mxu0 0.0
    %340 = vmatpush2.msra.mxu0 0.0
    %341 = vmatprep.subr.mxu0 0.0
    %342 = vmatpush2.msra.mxu0 0.0
    %343 = vmatprep.subr.mxu0 0.0
    %344 = vmatpush2.msra.mxu0 0.0
    %345 = vmatprep.mubr.f32.mxu0 0.0
    %346 = vmatmul.mubr.f32.gmra.mxu0 %v260
    %v347 = vpop.f32.mrf.mxu0
    %v348 = vadd.f32 %v280, %v347
    %v349 = vpop.f32.mrf.mxu0
    %350 = vdwg.mxu0
    %351 = vst [vmem:[#allocation11] sm:$0xff] %v348
    // Predicated region
    $region42: #{tpu_custom_call.1} parent=1 // pred_check
      _
    $region43: #{tpu_custom_call.1} parent=1 // pred_check_branch
      %353 = sbr.rel (0) target = $region45
    $region44: #{tpu_custom_call.1} parent=1 // pred_region
      %s355 = ssub.s32 128, 128
      %356 = vsyncadd [#allocation4], %s355
      %s358 = sshll.u32 [#allocation11], 4
      %s359 = int_to_ptr.vmem [resolvable:$true] %s358
      %361 = dma.vmem_to_hbm [thread:$0]  %s359, 128, %s5, [#allocation4]
    $region45: #{tpu_custom_call.1} parent=1 // pred_fallthru
      _
    // Predicated region
    $region46: #{tpu_custom_call.1} parent=1 // pred_check
      _
    $region47: #{tpu_custom_call.1} parent=1 // pred_check_branch
      %363 = sbr.rel (0) target = $region49
    $region48: #{tpu_custom_call.1} parent=1 // pred_region
      %364 = dma.done [#allocation4], 128
    $region49: #{tpu_custom_call.1} parent=1 // pred_fallthru
      _
    %365 = vsyncpa [#allocation3], 1
    %366 = vsyncpa [#allocation6], 1
    %367 = vsyncpa [#allocation9], 1
    %368 = vsyncpa [#allocation4], 1

</llo_original>
